<compile_context>
chip_gen: v7x
topology: tpu7x:2x2x1
jax: 0.10.0
libtpu: 0.0.40
codegen_flags: <defaults>
</compile_context>

<pallas_src>
import jax
import jax.numpy as jnp
from jax import lax
from jax.experimental import pallas as pl
from jax.experimental.pallas import tpu as pltpu


def _round_up(x, m):
    return ((x + m - 1) // m) * m


def _pooler_answer_class_kernel(hid_ref, sp_ref, ci_ref, w0s_ref, w0c_ref,
                                b0_ref, w1t_ref, out_ref):
    """One batch tile: gather(start,cls) -> dense_0 + bias -> tanh -> dense_1."""
    tb, seq, hsz = hid_ref.shape

    hid = hid_ref[...].astype(jnp.float32)                 # (tb, S, H)
    sp = sp_ref[...]                                       # (tb, 1) int32
    ci = ci_ref[...]                                       # (tb, 1) int32

    # Data-dependent row gather, vectorized: one-hot over the sequence axis,
    # then a sublane reduce. Exact (single nonzero per row).
    pos = lax.broadcasted_iota(jnp.int32, (tb, seq), 1)    # (tb, S)
    start_sel = (pos == sp).astype(jnp.float32)            # (tb, S)
    cls_sel = (pos == ci).astype(jnp.float32)              # (tb, S)
    start_states = jnp.sum(hid * start_sel[:, :, None], axis=1)   # (tb, H)
    cls_states = jnp.sum(hid * cls_sel[:, :, None], axis=1)       # (tb, H)

    # dense_0: concat([start, cls]) @ W0 + b0  ==  start @ W0[:H] + cls @ W0[H:] + b0
    # (concat folded into split weights, bias folded into the accumulate).
    w_dtype = w0s_ref.dtype
    pre = (jnp.dot(start_states.astype(w_dtype), w0s_ref[...],
                   preferred_element_type=jnp.float32)
           + jnp.dot(cls_states.astype(w_dtype), w0c_ref[...],
                     preferred_element_type=jnp.float32)
           + b0_ref[...].astype(jnp.float32))              # (tb, H)

    act = jnp.tanh(pre)                                    # EUP, (tb, H)

    # dense_1 (out_features=1, no bias): lane reduce instead of a degenerate
    # N=1 matmul.
    logits = jnp.sum(act * w1t_ref[...].astype(jnp.float32),
                     axis=-1, keepdims=True)               # (tb, 1)
    out_ref[...] = logits.astype(out_ref.dtype)


def pooler_answer_class_pallas(hidden_states, dense0_weight, dense0_bias,
                               dense1_weight, start_states=None,
                               start_positions=None, cls_index=None,
                               *, compute_dtype=None, batch_tile=None,
                               interpret=False):
    """hidden_states: (B, S, H); dense0_weight: (H, 2H) [torch (out,in) layout];
    dense0_bias: (H,); dense1_weight: (1, H). Returns (B,) logits."""
    assert start_states is not None or start_positions is not None, \
        "One of start_states, start_positions should be not None"
    B, S, H = hidden_states.shape
    assert dense0_weight.shape == (H, 2 * H)
    assert dense0_bias.shape == (H,)
    assert dense1_weight.shape == (1, H)
    out_dtype = hidden_states.dtype

    # cls_index=None -> last token of the ORIGINAL sequence.
    if cls_index is None:
        cls_pos = jnp.full((B,), S - 1, dtype=jnp.int32)
    else:
        cls_pos = cls_index.astype(jnp.int32)

    if start_positions is not None:
        hid = hidden_states
        start_pos = start_positions.astype(jnp.int32)
    else:
        # start_states given directly: append it as an extra "token" per row so
        # the same in-kernel gather covers this path too.
        hid = jnp.concatenate([hidden_states, start_states[:, None, :]], axis=1)
        start_pos = jnp.full((B,), S, dtype=jnp.int32)
    S_eff = hid.shape[1]

    # Optional low-precision compute (halves HBM traffic of hidden_states);
    # accumulation stays f32 in-kernel.
    w_dtype = compute_dtype if compute_dtype is not None else dense0_weight.dtype
    if compute_dtype is not None:
        hid = hid.astype(compute_dtype)

    # torch nn.Linear: y = x @ W.T + b with W: (out, in) -> transpose + split.
    w0_start = dense0_weight[:, :H].T.astype(w_dtype)      # (H, H)
    w0_cls = dense0_weight[:, H:].T.astype(w_dtype)        # (H, H)
    b0 = dense0_bias.reshape(1, H).astype(jnp.float32)     # (1, H)
    w1t = dense1_weight.reshape(1, H).astype(w_dtype)      # (1, H)

    # Batch tiling: a single grid step for small problems, 8-aligned tiles
    # sized to fit the scoped-VMEM budget otherwise.
    itemsize = jnp.dtype(hid.dtype).itemsize
    if batch_tile is None:
        batch_tile = _round_up(B, 8)
        budget = 8 * 1024 * 1024          # double-buffered hidden slab target
        while batch_tile > 8 and 2 * batch_tile * S_eff * H * itemsize > budget:
            batch_tile = max(_round_up(batch_tile // 2, 8), 8)
    Bp = _round_up(B, batch_tile)

    if Bp != B:
        pad = Bp - B
        hid = jnp.pad(hid, ((0, pad), (0, 0), (0, 0)))
        start_pos = jnp.pad(start_pos, ((0, pad),))
        cls_pos = jnp.pad(cls_pos, ((0, pad),))
    sp2d = start_pos.reshape(Bp, 1)
    ci2d = cls_pos.reshape(Bp, 1)

    grid = (Bp // batch_tile,)

    w_itemsize = jnp.dtype(w_dtype).itemsize
    flops = int(4 * Bp * S_eff * H          # one-hot gather (mul+add, x2)
                + 4 * Bp * H * H            # dense_0 (K = 2H)
                + 2 * Bp * H)               # dense_1
    bytes_accessed = int(Bp * S_eff * H * itemsize
                         + 2 * Bp * 4
                         + 2 * H * H * w_itemsize
                         + H * 4 + H * w_itemsize
                         + Bp * jnp.dtype(out_dtype).itemsize)
    cost = pl.CostEstimate(flops=flops, transcendentals=int(Bp * H),
                           bytes_accessed=bytes_accessed)

    est_vmem = (2 * batch_tile * S_eff * H * itemsize      # hidden (double-buffered)
                + 4 * batch_tile * 4 + 2 * batch_tile * 4  # positions + out
                + 2 * H * H * w_itemsize + 2 * H * 4)
    vmem_limit = None
    if est_vmem > 12 * 1024 * 1024:
        # Keep inside v7x's 64 MiB physical VMEM while unlocking big tiles.
        vmem_limit = min(int(2 * est_vmem), 48 * 1024 * 1024)

    out = pl.pallas_call(
        _pooler_answer_class_kernel,
        out_shape=jax.ShapeDtypeStruct((Bp, 1), out_dtype),
        grid=grid,
        in_specs=[
            pl.BlockSpec((batch_tile, S_eff, H), lambda i: (i, 0, 0)),  # hidden
            pl.BlockSpec((batch_tile, 1), lambda i: (i, 0)),            # start pos
            pl.BlockSpec((batch_tile, 1), lambda i: (i, 0)),            # cls pos
            pl.BlockSpec((H, H), lambda i: (0, 0)),                     # W0[:H].T
            pl.BlockSpec((H, H), lambda i: (0, 0)),                     # W0[H:].T
            pl.BlockSpec((1, H), lambda i: (0, 0)),                     # b0
            pl.BlockSpec((1, H), lambda i: (0, 0)),                     # W1 (row)
        ],
        out_specs=pl.BlockSpec((batch_tile, 1), lambda i: (i, 0)),
        compiler_params=pltpu.CompilerParams(
            dimension_semantics=("parallel",),
            vmem_limit_bytes=vmem_limit,
        ),
        cost_estimate=cost,
        interpret=interpret,
    )(hid, sp2d, ci2d, w0_start, w0_cls, b0, w1t)

    return out[:B, 0]


if __name__ == "__main__":
    # Small shapes consistent with the module: batch=2, seq=8, hidden=32.
    B, S, H = 2, 8, 32
    key = jax.random.PRNGKey(0)
    k1, k2, k3, k4, k5 = jax.random.split(key, 5)

    hidden_states = jax.random.normal(k1, (B, S, H), dtype=jnp.float32)
    dense0_w = 0.05 * jax.random.normal(k2, (H, 2 * H), dtype=jnp.float32)  # torch (out, in)
    dense0_b = 0.05 * jax.random.normal(k3, (H,), dtype=jnp.float32)
    dense1_w = 0.05 * jax.random.normal(k4, (1, H), dtype=jnp.float32)
    start_positions = jnp.array([3, 5], dtype=jnp.int32)
    cls_index = jnp.array([7, 0], dtype=jnp.int32)
    start_states_in = jax.random.normal(k5, (B, H), dtype=jnp.float32)

    def ref_forward(hidden, start_states=None, start_positions=None, cls_index=None):
        bsz = hidden.shape[0]
        if start_positions is not None:
            start_states = hidden[jnp.arange(bsz), start_positions]
        if cls_index is not None:
            cls_tok = hidden[jnp.arange(bsz), cls_index]
        else:
            cls_tok = hidden[:, -1, :]
        x = jnp.concatenate([start_states, cls_tok], axis=-1)
        x = jnp.tanh(x @ dense0_w.T + dense0_b)
        return (x @ dense1_w.T)[:, 0]

    # Path 1: start_positions + cls_index, bf16 compute (perf-review item).
    out1 = jax.block_until_ready(pooler_answer_class_pallas(
        hidden_states, dense0_w, dense0_b, dense1_w,
        start_positions=start_positions, cls_index=cls_index,
        compute_dtype=jnp.bfloat16))
    ref1 = ref_forward(hidden_states, start_positions=start_positions,
                       cls_index=cls_index)
    assert out1.shape == (B,)
    assert jnp.allclose(out1, ref1, atol=5e-3, rtol=5e-2)

    # Path 2: cls_index=None -> last token (f32 compute).
    out2 = jax.block_until_ready(pooler_answer_class_pallas(
        hidden_states, dense0_w, dense0_b, dense1_w,
        start_positions=start_positions))
    ref2 = ref_forward(hidden_states, start_positions=start_positions,
                       cls_index=None)
    assert jnp.allclose(out2, ref2, atol=5e-3, rtol=5e-2)

    # Path 3: start_states given directly (no start_positions).
    out3 = jax.block_until_ready(pooler_answer_class_pallas(
        hidden_states, dense0_w, dense0_b, dense1_w,
        start_states=start_states_in, cls_index=cls_index))
    ref3 = ref_forward(hidden_states, start_states=start_states_in,
                       cls_index=cls_index)
    assert jnp.allclose(out3, ref3, atol=5e-3, rtol=5e-2)

    print("KERNEL_OK")
</pallas_src>

<mosaic_0001>
module attributes {stable_mosaic.version = 11 : i64} {
  func.func @_pooler_answer_class_kernel(%arg0: i32, %arg1: memref<8x8x32xbf16, #tpu.memory_space<vmem>>, %arg2: memref<8x1xi32, #tpu.memory_space<vmem>>, %arg3: memref<8x1xi32, #tpu.memory_space<vmem>>, %arg4: memref<32x32xbf16, #tpu.memory_space<vmem>>, %arg5: memref<32x32xbf16, #tpu.memory_space<vmem>>, %arg6: memref<1x32xf32, #tpu.memory_space<vmem>>, %arg7: memref<1x32xbf16, #tpu.memory_space<vmem>>, %arg8: memref<8x1xf32, #tpu.memory_space<vmem>>) attributes {dimension_semantics = [#tpu.dimension_semantics<parallel>], iteration_bounds = array<i64: 1>, scalar_prefetch = 0 : i64, scratch_operands = 0 : i64, tpu.core_type = #tpu.core_type<tc>, window_params = [{transform_indices = @transform_0, window_bounds = array<i64: 8, 8, 32>}, {transform_indices = @transform_1, window_bounds = array<i64: 8, 1>}, {transform_indices = @transform_2, window_bounds = array<i64: 8, 1>}, {pipeline_mode = #tpu.pipeline_mode<synchronous>, transform_indices = @transform_3, window_bounds = array<i64: 32, 32>}, {pipeline_mode = #tpu.pipeline_mode<synchronous>, transform_indices = @transform_4, window_bounds = array<i64: 32, 32>}, {pipeline_mode = #tpu.pipeline_mode<synchronous>, transform_indices = @transform_5, window_bounds = array<i64: 1, 32>}, {pipeline_mode = #tpu.pipeline_mode<synchronous>, transform_indices = @transform_6, window_bounds = array<i64: 1, 32>}, {transform_indices = @transform_7, window_bounds = array<i64: 8, 1>}]} {
    %c0 = arith.constant 0 : index
    %c0_0 = arith.constant 0 : index
    %c0_1 = arith.constant 0 : index
    %0 = vector.load %arg1[%c0, %c0_0, %c0_1] : memref<8x8x32xbf16, #tpu.memory_space<vmem>>, vector<8x8x32xbf16>
    %1 = arith.extf %0 : vector<8x8x32xbf16> to vector<8x8x32xf32>
    %c0_2 = arith.constant 0 : index
    %c0_3 = arith.constant 0 : index
    %2 = vector.load %arg2[%c0_2, %c0_3] : memref<8x1xi32, #tpu.memory_space<vmem>>, vector<8x1xi32>
    %c0_4 = arith.constant 0 : index
    %c0_5 = arith.constant 0 : index
    %3 = vector.load %arg3[%c0_4, %c0_5] : memref<8x1xi32, #tpu.memory_space<vmem>>, vector<8x1xi32>
    %4 = tpu.iota {dimensions = array<i32: 1>} : vector<8x8xi32>
    %5 = vector.broadcast %2 : vector<8x1xi32> to vector<8x8xi32>
    %6 = arith.cmpi eq, %4, %5 : vector<8x8xi32>
    %7 = arith.extui %6 : vector<8x8xi1> to vector<8x8xi32>
    %8 = arith.sitofp %7 : vector<8x8xi32> to vector<8x8xf32>
    %9 = vector.broadcast %3 : vector<8x1xi32> to vector<8x8xi32>
    %10 = arith.cmpi eq, %4, %9 : vector<8x8xi32>
    %11 = arith.extui %10 : vector<8x8xi1> to vector<8x8xi32>
    %12 = arith.sitofp %11 : vector<8x8xi32> to vector<8x8xf32>
    %13 = vector.shape_cast %8 : vector<8x8xf32> to vector<8x8x1xf32>
    %14 = vector.broadcast %13 : vector<8x8x1xf32> to vector<8x8x32xf32>
    %15 = arith.mulf %1, %14 : vector<8x8x32xf32>
    %cst = arith.constant dense<0.000000e+00> : vector<8x32xf32>
    %16 = vector.multi_reduction <add>, %15, %cst [1] : vector<8x8x32xf32> to vector<8x32xf32>
    %17 = vector.shape_cast %12 : vector<8x8xf32> to vector<8x8x1xf32>
    %18 = vector.broadcast %17 : vector<8x8x1xf32> to vector<8x8x32xf32>
    %19 = arith.mulf %1, %18 : vector<8x8x32xf32>
    %cst_6 = arith.constant dense<0.000000e+00> : vector<8x32xf32>
    %20 = vector.multi_reduction <add>, %19, %cst_6 [1] : vector<8x8x32xf32> to vector<8x32xf32>
    %21 = arith.truncf %16 : vector<8x32xf32> to vector<8x32xbf16>
    %c0_7 = arith.constant 0 : index
    %c0_8 = arith.constant 0 : index
    %22 = vector.load %arg4[%c0_7, %c0_8] : memref<32x32xbf16, #tpu.memory_space<vmem>>, vector<32x32xbf16>
    %cst_9 = arith.constant dense<0.000000e+00> : vector<8x32xf32>
    %23 = tpu.matmul %21, %22, %cst_9 {dimension_numbers = #tpu.dot_dimension_numbers<[1], [0], [0], [1], [0, 0, 1, 1], [], []>} : vector<8x32xbf16>, vector<32x32xbf16>, vector<8x32xf32> -> vector<8x32xf32>
    %24 = arith.truncf %20 : vector<8x32xf32> to vector<8x32xbf16>
    %c0_10 = arith.constant 0 : index
    %c0_11 = arith.constant 0 : index
    %25 = vector.load %arg5[%c0_10, %c0_11] : memref<32x32xbf16, #tpu.memory_space<vmem>>, vector<32x32xbf16>
    %cst_12 = arith.constant dense<0.000000e+00> : vector<8x32xf32>
    %26 = tpu.matmul %24, %25, %cst_12 {dimension_numbers = #tpu.dot_dimension_numbers<[1], [0], [0], [1], [0, 0, 1, 1], [], []>} : vector<8x32xbf16>, vector<32x32xbf16>, vector<8x32xf32> -> vector<8x32xf32>
    %27 = arith.addf %23, %26 : vector<8x32xf32>
    %c0_13 = arith.constant 0 : index
    %c0_14 = arith.constant 0 : index
    %28 = vector.load %arg6[%c0_13, %c0_14] : memref<1x32xf32, #tpu.memory_space<vmem>>, vector<1x32xf32>
    %29 = vector.broadcast %28 : vector<1x32xf32> to vector<8x32xf32>
    %30 = arith.addf %27, %29 : vector<8x32xf32>
    %31 = math.tanh %30 : vector<8x32xf32>
    %c0_15 = arith.constant 0 : index
    %c0_16 = arith.constant 0 : index
    %32 = vector.load %arg7[%c0_15, %c0_16] : memref<1x32xbf16, #tpu.memory_space<vmem>>, vector<1x32xbf16>
    %33 = arith.extf %32 : vector<1x32xbf16> to vector<1x32xf32>
    %34 = vector.broadcast %33 : vector<1x32xf32> to vector<8x32xf32>
    %35 = arith.mulf %31, %34 : vector<8x32xf32>
    %cst_17 = arith.constant dense<0.000000e+00> : vector<8xf32>
    %36 = vector.multi_reduction <add>, %35, %cst_17 [1] : vector<8x32xf32> to vector<8xf32>
    %37 = vector.shape_cast %36 : vector<8xf32> to vector<8x1xf32>
    %c0_18 = arith.constant 0 : index
    %c0_19 = arith.constant 0 : index
    %38 = vector.load %arg8[%c0_18, %c0_19] : memref<8x1xf32, #tpu.memory_space<vmem>>, vector<8x1xf32>
    tpu.vector_store %arg8[%c0_18, %c0_19], %37 {strides = array<i32>} : memref<8x1xf32, #tpu.memory_space<vmem>>, vector<8x1xf32>,
    return
  }
  func.func @transform_0(%arg0: i32) -> (i32, i32, i32) {
    %c0_i32 = arith.constant 0 : i32
    %c0_i32_0 = arith.constant 0 : i32
    %c0_i32_1 = arith.constant 0 : i32
    return %arg0, %c0_i32, %c0_i32_0 : i32, i32, i32
  }
  func.func @transform_1(%arg0: i32) -> (i32, i32) {
    %c0_i32 = arith.constant 0 : i32
    %c0_i32_0 = arith.constant 0 : i32
    return %arg0, %c0_i32 : i32, i32
  }
  func.func @transform_2(%arg0: i32) -> (i32, i32) {
    %c0_i32 = arith.constant 0 : i32
    %c0_i32_0 = arith.constant 0 : i32
    return %arg0, %c0_i32 : i32, i32
  }
  func.func @transform_3(%arg0: i32) -> (i32, i32) {
    %c0_i32 = arith.constant 0 : i32
    %c0_i32_0 = arith.constant 0 : i32
    %c0_i32_1 = arith.constant 0 : i32
    return %c0_i32, %c0_i32_0 : i32, i32
  }
  func.func @transform_4(%arg0: i32) -> (i32, i32) {
    %c0_i32 = arith.constant 0 : i32
    %c0_i32_0 = arith.constant 0 : i32
    %c0_i32_1 = arith.constant 0 : i32
    return %c0_i32, %c0_i32_0 : i32, i32
  }
  func.func @transform_5(%arg0: i32) -> (i32, i32) {
    %c0_i32 = arith.constant 0 : i32
    %c0_i32_0 = arith.constant 0 : i32
    %c0_i32_1 = arith.constant 0 : i32
    return %c0_i32, %c0_i32_0 : i32, i32
  }
  func.func @transform_6(%arg0: i32) -> (i32, i32) {
    %c0_i32 = arith.constant 0 : i32
    %c0_i32_0 = arith.constant 0 : i32
    %c0_i32_1 = arith.constant 0 : i32
    return %c0_i32, %c0_i32_0 : i32, i32
  }
  func.func @transform_7(%arg0: i32) -> (i32, i32) {
    %c0_i32 = arith.constant 0 : i32
    %c0_i32_0 = arith.constant 0 : i32
    return %arg0, %c0_i32 : i32, i32
  }
}

</mosaic_0001>

<llo_original>
// kernel: tpu_custom_call.1
$region0: #{tpu_custom_call.1}
  #allocation0 [shape = 'u32[]', space=smem, size = 0x4, offset = 0x4, fixed_abs, tag = 'smem constant byte address 0x4 - core index']
  #allocation1 [shape = 'u32[144,128]{1,0:T(1,128)}', space=vmem, size = 0x12000, scoped, tag = 'internal scratch']
  %s0 = inlined_call_operand.hbm [shape: bf16[8,8,32], index: 0, kind: input, shape index: {}]
  %s1 = inlined_call_operand.vmem [shape: s32[8,1], index: 1, kind: input, shape index: {}]
  %s2 = inlined_call_operand.vmem [shape: s32[8,1], index: 2, kind: input, shape index: {}]
  %s3 = inlined_call_operand.vmem [shape: bf16[32,32], index: 3, kind: input, shape index: {}]
  %s4 = inlined_call_operand.vmem [shape: bf16[32,32], index: 4, kind: input, shape index: {}]
  %s5 = inlined_call_operand.vmem [shape: f32[1,32], index: 5, kind: input, shape index: {}]
  %s6 = inlined_call_operand.vmem [shape: bf16[1,32], index: 6, kind: input, shape index: {}]
  %s7 = inlined_call_operand.vmem [shape: f32[8,1], index: 7, kind: output, shape index: {}]
  %s8 = sld [smem:[#allocation0]]
  $region42: #{tpu_custom_call.1} parent=0
    _
  %s10 = ssub.s32 1, %s8
  %s11 = scalar_select 0, %s10, %s8
  $region1: #{tpu_custom_call.1} parent=0
    #allocation2 [shape = 'u8[16384]{0}', space=vmem, size = 0x4000, scoped, tag = 'input window, operand 0, single buffered']
    #allocation3 [shape = 's32[1]{0}', space=sflag, size = 0x4, scoped, tag = 'scoped memory for tpu_custom_call.1']
    %12 = vsyncpa [#allocation3], 0
    // Predicated region
    $region2: #{tpu_custom_call.1} parent=1 // pred_check
      _
    $region3: #{tpu_custom_call.1} parent=1 // pred_check_branch
      %14 = sbr.rel (0) target = $region5
    $region4: #{tpu_custom_call.1} parent=1 // pred_region
      %s16 = ssub.s32 512, 512
      %17 = vsyncadd [#allocation3], %s16
      %s18 = sshll.u32 [#allocation2], 4
      %s19 = int_to_ptr.vmem [resolvable:$true] %s18
      %24 = dma.hbm_to_vmem [thread:$0]  %s0, 512, %s19, [#allocation3], 64, 64, 4
    $region5: #{tpu_custom_call.1} parent=1 // pred_fallthru
      _
    // Predicated region
    $region6: #{tpu_custom_call.1} parent=1 // pred_check
      _
    $region7: #{tpu_custom_call.1} parent=1 // pred_check_branch
      %26 = sbr.rel (0) target = $region9
    $region8: #{tpu_custom_call.1} parent=1 // pred_region
      _
    $region9: #{tpu_custom_call.1} parent=1 // pred_fallthru
      _
    // Predicated region
    $region10: #{tpu_custom_call.1} parent=1 // pred_check
      _
    $region11: #{tpu_custom_call.1} parent=1 // pred_check_branch
      %28 = sbr.rel (0) target = $region13
    $region12: #{tpu_custom_call.1} parent=1 // pred_region
      _
    $region13: #{tpu_custom_call.1} parent=1 // pred_fallthru
      _
    // Predicated region
    $region14: #{tpu_custom_call.1} parent=1 // pred_check
      _
    $region15: #{tpu_custom_call.1} parent=1 // pred_check_branch
      %30 = sbr.rel (0) target = $region17
    $region16: #{tpu_custom_call.1} parent=1 // pred_region
      _
    $region17: #{tpu_custom_call.1} parent=1 // pred_fallthru
      _
    // Predicated region
    $region18: #{tpu_custom_call.1} parent=1 // pred_check
      _
    $region19: #{tpu_custom_call.1} parent=1 // pred_check_branch
      %32 = sbr.rel (0) target = $region21
    $region20: #{tpu_custom_call.1} parent=1 // pred_region
      _
    $region21: #{tpu_custom_call.1} parent=1 // pred_fallthru
      _
    // Predicated region
    $region22: #{tpu_custom_call.1} parent=1 // pred_check
      _
    $region23: #{tpu_custom_call.1} parent=1 // pred_check_branch
      %34 = sbr.rel (0) target = $region25
    $region24: #{tpu_custom_call.1} parent=1 // pred_region
      _
    $region25: #{tpu_custom_call.1} parent=1 // pred_fallthru
      _
    // Predicated region
    $region26: #{tpu_custom_call.1} parent=1 // pred_check
      _
    $region27: #{tpu_custom_call.1} parent=1 // pred_check_branch
      %36 = sbr.rel (0) target = $region29
    $region28: #{tpu_custom_call.1} parent=1 // pred_region
      _
    $region29: #{tpu_custom_call.1} parent=1 // pred_fallthru
      _
    // Predicated region
    $region30: #{tpu_custom_call.1} parent=1 // pred_check
      _
    $region31: #{tpu_custom_call.1} parent=1 // pred_check_branch
      %38 = sbr.rel (0) target = $region33
    $region32: #{tpu_custom_call.1} parent=1 // pred_region
      %39 = dma.done [#allocation3], 512
    $region33: #{tpu_custom_call.1} parent=1 // pred_fallthru
      _
    %v41 = vld [vmem:[#allocation2] sm:$0xf]
    %v42 = vld [vmem:[#allocation2 + $0x4] sm:$0xf]
    %v43 = vld [vmem:[#allocation2 + $0x8] sm:$0xf]
    %v44 = vld [vmem:[#allocation2 + $0xc] sm:$0xf]
    %v45 = vld [vmem:[#allocation2 + $0x10] sm:$0xf]
    %v46 = vld [vmem:[#allocation2 + $0x14] sm:$0xf]
    %v47 = vld [vmem:[#allocation2 + $0x18] sm:$0xf]
    %v48 = vld [vmem:[#allocation2 + $0x1c] sm:$0xf]
    %v49 = vunpack.c.l.bf16 %v41
    %v50 = vunpack.c.l.bf16 %v42
    %v51 = vunpack.c.l.bf16 %v43
    %v52 = vunpack.c.l.bf16 %v44
    %v53 = vunpack.c.l.bf16 %v45
    %v54 = vunpack.c.l.bf16 %v46
    %v55 = vunpack.c.l.bf16 %v47
    %v56 = vunpack.c.l.bf16 %v48
    %v57 = vld [vmem:[%s1] sm:$0xff]
    %v58 = vld [vmem:[%s2] sm:$0xff]
    %v59 = vlaneseq
    %v60 = vand.u32 %v59, 127
    %61 = vset.pattern.permute.xlu0 0
    %62 = vperm.xlu0 %61, %v57
    %v63 = vpop.permute.xlu0 %62
    %vm64 = vcmp.eq.s32.totalorder %v60, %v63
    %v65 = vsel %vm64, 1, 0
    %v66 = vcvt.s32.f32 %v65
    %67 = vset.pattern.permute.xlu0 0
    %68 = vperm.xlu0 %67, %v58
    %v69 = vpop.permute.xlu0 %68
    %vm70 = vcmp.eq.s32.totalorder %v60, %v69
    %v71 = vsel %vm70, 1, 0
    %v72 = vcvt.s32.f32 %v71
    %v73 = vlaneseq
    %v74 = vshrl.u32 %v73, 7
    %v75 = vsub.s32 0, %v74
    %v76 = vrot.slane %v66, %v75
    %78 = vbcast.lane.b32.xlu0 %v76, 256
    %v79 = vpop.permute.xlu0 %78
    %v80 = vlaneseq
    %v81 = vshrl.u32 %v80, 7
    %v82 = vsub.s32 1, %v81
    %v83 = vrot.slane %v66, %v82
    %85 = vbcast.lane.b32.xlu0 %v83, 256
    %v86 = vpop.permute.xlu0 %85
    %v87 = vlaneseq
    %v88 = vshrl.u32 %v87, 7
    %v89 = vsub.s32 2, %v88
    %v90 = vrot.slane %v66, %v89
    %92 = vbcast.lane.b32.xlu0 %v90, 256
    %v93 = vpop.permute.xlu0 %92
    %v94 = vlaneseq
    %v95 = vshrl.u32 %v94, 7
    %v96 = vsub.s32 3, %v95
    %v97 = vrot.slane %v66, %v96
    %99 = vbcast.lane.b32.xlu0 %v97, 256
    %v100 = vpop.permute.xlu0 %99
    %v101 = vlaneseq
    %v102 = vshrl.u32 %v101, 7
    %v103 = vsub.s32 4, %v102
    %v104 = vrot.slane %v66, %v103
    %106 = vbcast.lane.b32.xlu0 %v104, 256
    %v107 = vpop.permute.xlu0 %106
    %v108 = vlaneseq
    %v109 = vshrl.u32 %v108, 7
    %v110 = vsub.s32 5, %v109
    %v111 = vrot.slane %v66, %v110
    %113 = vbcast.lane.b32.xlu0 %v111, 256
    %v114 = vpop.permute.xlu0 %113
    %v115 = vlaneseq
    %v116 = vshrl.u32 %v115, 7
    %v117 = vsub.s32 6, %v116
    %v118 = vrot.slane %v66, %v117
    %120 = vbcast.lane.b32.xlu0 %v118, 256
    %v121 = vpop.permute.xlu0 %120
    %v122 = vlaneseq
    %v123 = vshrl.u32 %v122, 7
    %v124 = vsub.s32 7, %v123
    %v125 = vrot.slane %v66, %v124
    %127 = vbcast.lane.b32.xlu0 %v125, 256
    %v128 = vpop.permute.xlu0 %127
    %v129 = vmul.f32 %v49, %v79
    %v130 = vmul.f32 %v50, %v86
    %v131 = vmul.f32 %v51, %v93
    %v132 = vmul.f32 %v52, %v100
    %v133 = vmul.f32 %v53, %v107
    %v134 = vmul.f32 %v54, %v114
    %v135 = vmul.f32 %v55, %v121
    %v136 = vmul.f32 %v56, %v128
    %vm137 = vcmask 261120
    %v138 = vsel %vm137, %v129, 0.0
    %v139 = vrot.slane %v138, 4
    %v140 = vadd.f32 %v138, %v139
    %v141 = vrot.slane %v140, 2
    %v142 = vadd.f32 %v140, %v141
    %v143 = vrot.slane %v142, 1
    %v144 = vadd.f32 %v142, %v143
    %v145 = vsel %vm137, %v130, 0.0
    %v146 = vrot.slane %v145, 4
    %v147 = vadd.f32 %v145, %v146
    %v148 = vrot.slane %v147, 2
    %v149 = vadd.f32 %v147, %v148
    %v150 = vrot.slane %v149, 1
    %v151 = vadd.f32 %v149, %v150
    %v152 = vsel %vm137, %v131, 0.0
    %v153 = vrot.slane %v152, 4
    %v154 = vadd.f32 %v152, %v153
    %v155 = vrot.slane %v154, 2
    %v156 = vadd.f32 %v154, %v155
    %v157 = vrot.slane %v156, 1
    %v158 = vadd.f32 %v156, %v157
    %v159 = vsel %vm137, %v132, 0.0
    %v160 = vrot.slane %v159, 4
    %v161 = vadd.f32 %v159, %v160
    %v162 = vrot.slane %v161, 2
    %v163 = vadd.f32 %v161, %v162
    %v164 = vrot.slane %v163, 1
    %v165 = vadd.f32 %v163, %v164
    %v166 = vsel %vm137, %v133, 0.0
    %v167 = vrot.slane %v166, 4
    %v168 = vadd.f32 %v166, %v167
    %v169 = vrot.slane %v168, 2
    %v170 = vadd.f32 %v168, %v169
    %v171 = vrot.slane %v170, 1
    %v172 = vadd.f32 %v170, %v171
    %v173 = vsel %vm137, %v134, 0.0
    %v174 = vrot.slane %v173, 4
    %v175 = vadd.f32 %v173, %v174
    %v176 = vrot.slane %v175, 2
    %v177 = vadd.f32 %v175, %v176
    %v178 = vrot.slane %v177, 1
    %v179 = vadd.f32 %v177, %v178
    %v180 = vsel %vm137, %v135, 0.0
    %v181 = vrot.slane %v180, 4
    %v182 = vadd.f32 %v180, %v181
    %v183 = vrot.slane %v182, 2
    %v184 = vadd.f32 %v182, %v183
    %v185 = vrot.slane %v184, 1
    %v186 = vadd.f32 %v184, %v185
    %v187 = vsel %vm137, %v136, 0.0
    %v188 = vrot.slane %v187, 4
    %v189 = vadd.f32 %v187, %v188
    %v190 = vrot.slane %v189, 2
    %v191 = vadd.f32 %v189, %v190
    %v192 = vrot.slane %v191, 1
    %v193 = vadd.f32 %v191, %v192
    %v194 = vlaneseq
    %v195 = vshrl.u32 %v194, 7
    %v196 = vsub.s32 0, %v195
    %v197 = vrot.slane %v72, %v196
    %199 = vbcast.lane.b32.xlu0 %v197, 256
    %v200 = vpop.permute.xlu0 %199
    %v201 = vlaneseq
    %v202 = vshrl.u32 %v201, 7
    %v203 = vsub.s32 1, %v202
    %v204 = vrot.slane %v72, %v203
    %206 = vbcast.lane.b32.xlu0 %v204, 256
    %v207 = vpop.permute.xlu0 %206
    %v208 = vlaneseq
    %v209 = vshrl.u32 %v208, 7
    %v210 = vsub.s32 2, %v209
    %v211 = vrot.slane %v72, %v210
    %213 = vbcast.lane.b32.xlu0 %v211, 256
    %v214 = vpop.permute.xlu0 %213
    %v215 = vlaneseq
    %v216 = vshrl.u32 %v215, 7
    %v217 = vsub.s32 3, %v216
    %v218 = vrot.slane %v72, %v217
    %220 = vbcast.lane.b32.xlu0 %v218, 256
    %v221 = vpop.permute.xlu0 %220
    %v222 = vlaneseq
    %v223 = vshrl.u32 %v222, 7
    %v224 = vsub.s32 4, %v223
    %v225 = vrot.slane %v72, %v224
    %227 = vbcast.lane.b32.xlu0 %v225, 256
    %v228 = vpop.permute.xlu0 %227
    %v229 = vlaneseq
    %v230 = vshrl.u32 %v229, 7
    %v231 = vsub.s32 5, %v230
    %v232 = vrot.slane %v72, %v231
    %234 = vbcast.lane.b32.xlu0 %v232, 256
    %v235 = vpop.permute.xlu0 %234
    %v236 = vlaneseq
    %v237 = vshrl.u32 %v236, 7
    %v238 = vsub.s32 6, %v237
    %v239 = vrot.slane %v72, %v238
    %241 = vbcast.lane.b32.xlu0 %v239, 256
    %v242 = vpop.permute.xlu0 %241
    %v243 = vlaneseq
    %v244 = vshrl.u32 %v243, 7
    %v245 = vsub.s32 7, %v244
    %v246 = vrot.slane %v72, %v245
    %248 = vbcast.lane.b32.xlu0 %v246, 256
    %v249 = vpop.permute.xlu0 %248
    %v250 = vmul.f32 %v49, %v200
    %v251 = vmul.f32 %v50, %v207
    %v252 = vmul.f32 %v51, %v214
    %v253 = vmul.f32 %v52, %v221
    %v254 = vmul.f32 %v53, %v228
    %v255 = vmul.f32 %v54, %v235
    %v256 = vmul.f32 %v55, %v242
    %v257 = vmul.f32 %v56, %v249
    %v258 = vsel %vm137, %v250, 0.0
    %v259 = vrot.slane %v258, 4
    %v260 = vadd.f32 %v258, %v259
    %v261 = vrot.slane %v260, 2
    %v262 = vadd.f32 %v260, %v261
    %v263 = vrot.slane %v262, 1
    %v264 = vadd.f32 %v262, %v263
    %v265 = vsel %vm137, %v251, 0.0
    %v266 = vrot.slane %v265, 4
    %v267 = vadd.f32 %v265, %v266
    %v268 = vrot.slane %v267, 2
    %v269 = vadd.f32 %v267, %v268
    %v270 = vrot.slane %v269, 1
    %v271 = vadd.f32 %v269, %v270
    %v272 = vsel %vm137, %v252, 0.0
    %v273 = vrot.slane %v272, 4
    %v274 = vadd.f32 %v272, %v273
    %v275 = vrot.slane %v274, 2
    %v276 = vadd.f32 %v274, %v275
    %v277 = vrot.slane %v276, 1
    %v278 = vadd.f32 %v276, %v277
    %v279 = vsel %vm137, %v253, 0.0
    %v280 = vrot.slane %v279, 4
    %v281 = vadd.f32 %v279, %v280
    %v282 = vrot.slane %v281, 2
    %v283 = vadd.f32 %v281, %v282
    %v284 = vrot.slane %v283, 1
    %v285 = vadd.f32 %v283, %v284
    %v286 = vsel %vm137, %v254, 0.0
    %v287 = vrot.slane %v286, 4
    %v288 = vadd.f32 %v286, %v287
    %v289 = vrot.slane %v288, 2
    %v290 = vadd.f32 %v288, %v289
    %v291 = vrot.slane %v290, 1
    %v292 = vadd.f32 %v290, %v291
    %v293 = vsel %vm137, %v255, 0.0
    %v294 = vrot.slane %v293, 4
    %v295 = vadd.f32 %v293, %v294
    %v296 = vrot.slane %v295, 2
    %v297 = vadd.f32 %v295, %v296
    %v298 = vrot.slane %v297, 1
    %v299 = vadd.f32 %v297, %v298
    %v300 = vsel %vm137, %v256, 0.0
    %v301 = vrot.slane %v300, 4
    %v302 = vadd.f32 %v300, %v301
    %v303 = vrot.slane %v302, 2
    %v304 = vadd.f32 %v302, %v303
    %v305 = vrot.slane %v304, 1
    %v306 = vadd.f32 %v304, %v305
    %v307 = vsel %vm137, %v257, 0.0
    %v308 = vrot.slane %v307, 4
    %v309 = vadd.f32 %v307, %v308
    %v310 = vrot.slane %v309, 2
    %v311 = vadd.f32 %v309, %v310
    %v312 = vrot.slane %v311, 1
    %v313 = vadd.f32 %v311, %v312
    %v314 = vpack.c.bf16 %v144, %v144
    %v315 = vpack.c.bf16 %v151, %v151
    %v316 = vpack.c.bf16 %v158, %v158
    %v317 = vpack.c.bf16 %v165, %v165
    %v318 = vpack.c.bf16 %v172, %v172
    %v319 = vpack.c.bf16 %v179, %v179
    %v320 = vpack.c.bf16 %v186, %v186
    %v321 = vpack.c.bf16 %v193, %v193
    %v322 = vld [vmem:[%s3] sm:$0xf]
    %v323 = vld [vmem:[%s3 + $0x4] sm:$0xf]
    %v324 = vld [vmem:[%s3 + $0x8] sm:$0xf]
    %v325 = vld [vmem:[%s3 + $0xc] sm:$0xf]
    %v326 = vpack.c.bf16 %v264, %v264
    %v327 = vpack.c.bf16 %v271, %v271
    %v328 = vpack.c.bf16 %v278, %v278
    %v329 = vpack.c.bf16 %v285, %v285
    %v330 = vpack.c.bf16 %v292, %v292
    %v331 = vpack.c.bf16 %v299, %v299
    %v332 = vpack.c.bf16 %v306, %v306
    %v333 = vpack.c.bf16 %v313, %v313
    %v334 = vld [vmem:[%s4] sm:$0xf]
    %v335 = vld [vmem:[%s4 + $0x4] sm:$0xf]
    %v336 = vld [vmem:[%s4 + $0x8] sm:$0xf]
    %v337 = vld [vmem:[%s4 + $0xc] sm:$0xf]
    %v346 = vunpack.c.l.b16 %v326
    %v347 = vunpack.c.l.b16 %v327
    %v348 = vunpack.c.l.b16 %v328
    %v349 = vunpack.c.l.b16 %v329
    %v350 = vunpack.c.l.b16 %v330
    %v351 = vunpack.c.l.b16 %v331
    %v352 = vunpack.c.l.b16 %v332
    %v353 = vunpack.c.l.b16 %v333
    %vm354 = vcmask 1041409
    %v355 = vsel %vm354, %v347, %v346
    %vm356 = vcmask 1042434
    %v357 = vsel %vm356, %v348, %v355
    %vm358 = vcmask 1043459
    %v359 = vsel %vm358, %v349, %v357
    %vm360 = vcmask 1044484
    %v361 = vsel %vm360, %v350, %v359
    %vm362 = vcmask 1045509
    %v363 = vsel %vm362, %v351, %v361
    %vm364 = vcmask 1046534
    %v365 = vsel %vm364, %v352, %v363
    %vm366 = vcmask 1047559
    %v367 = vsel %vm366, %v353, %v365
    %v368 = vpack.c.b16 %v367, %v367
    %v373 = vunpack.c.l.b16 %v334
    %v374 = vunpack.c.l.b16 %v335
    %v375 = vunpack.c.l.b16 %v336
    %v376 = vunpack.c.l.b16 %v337
    %v377 = vpack.c.b16 %v374, %v373
    %v378 = vpack.c.b16 %v376, %v375
    %v382 = vsel %vm137, %v368, 0
    %384 = vmatprep.subr.bf16.mxu0 0
    %385 = vmatpush1.bf16.msra.mxu0 %v377
    %386 = vmatprep.subr.bf16.mxu0 0
    %387 = vmatpush1.bf16.msra.mxu0 %v378
    %388 = vmatprep.subr.bf16.mxu0 0
    %389 = vmatpush1.bf16.msra.mxu0 0
    %390 = vmatprep.subr.bf16.mxu0 0
    %391 = vmatpush1.bf16.msra.mxu0 0
    %392 = vmatprep.subr.bf16.mxu0 0
    %393 = vmatpush1.bf16.msra.mxu0 0
    %394 = vmatprep.subr.bf16.mxu0 0
    %395 = vmatpush1.bf16.msra.mxu0 0
    %396 = vmatprep.subr.bf16.mxu0 0
    %397 = vmatpush1.bf16.msra.mxu0 0
    %398 = vmatprep.subr.bf16.mxu0 0
    %399 = vmatpush1.bf16.msra.mxu0 0
    %400 = vmatprep.subr.bf16.mxu0 0
    %401 = vmatpush1.bf16.msra.mxu0 0
    %402 = vmatprep.subr.bf16.mxu0 0
    %403 = vmatpush1.bf16.msra.mxu0 0
    %404 = vmatprep.subr.bf16.mxu0 0
    %405 = vmatpush1.bf16.msra.mxu0 0
    %406 = vmatprep.subr.bf16.mxu0 0
    %407 = vmatpush1.bf16.msra.mxu0 0
    %408 = vmatprep.subr.bf16.mxu0 0
    %409 = vmatpush1.bf16.msra.mxu0 0
    %410 = vmatprep.subr.bf16.mxu0 0
    %411 = vmatpush1.bf16.msra.mxu0 0
    %412 = vmatprep.subr.bf16.mxu0 0
    %413 = vmatpush1.bf16.msra.mxu0 0
    %414 = vmatprep.subr.bf16.mxu0 0
    %415 = vmatpush1.bf16.msra.mxu0 0
    %416 = vmatprep.mubr.bf16.mxu0 0
    %417 = vmatmul.mubr.bf16.gmra.mrb[0].mxu0 %v382
    %v418 = vpop.f32.mrb[0].mxu0
    %v419 = vadd.f32 0.0, %v418
    %v420 = vpop.f32.mrb[0].mxu0
    %v421 = vpop.f32.mrb[0].mxu0
    %v422 = vpop.f32.mrb[0].mxu0
    %423 = vdwg.mxu0
    %v432 = vunpack.c.l.b16 %v314
    %v433 = vunpack.c.l.b16 %v315
    %v434 = vunpack.c.l.b16 %v316
    %v435 = vunpack.c.l.b16 %v317
    %v436 = vunpack.c.l.b16 %v318
    %v437 = vunpack.c.l.b16 %v319
    %v438 = vunpack.c.l.b16 %v320
    %v439 = vunpack.c.l.b16 %v321
    %v440 = vsel %vm354, %v433, %v432
    %v441 = vsel %vm356, %v434, %v440
    %v442 = vsel %vm358, %v435, %v441
    %v443 = vsel %vm360, %v436, %v442
    %v444 = vsel %vm362, %v437, %v443
    %v445 = vsel %vm364, %v438, %v444
    %v446 = vsel %vm366, %v439, %v445
    %v447 = vpack.c.b16 %v446, %v446
    %v452 = vunpack.c.l.b16 %v322
    %v453 = vunpack.c.l.b16 %v323
    %v454 = vunpack.c.l.b16 %v324
    %v455 = vunpack.c.l.b16 %v325
    %v456 = vpack.c.b16 %v453, %v452
    %v457 = vpack.c.b16 %v455, %v454
    %v461 = vsel %vm137, %v447, 0
    %463 = vmatprep.subr.bf16.mxu0 0
    %464 = vmatpush1.bf16.msra.mxu0 %v456
    %465 = vmatprep.subr.bf16.mxu0 0
    %466 = vmatpush1.bf16.msra.mxu0 %v457
    %467 = vmatprep.subr.bf16.mxu0 0
    %468 = vmatpush1.bf16.msra.mxu0 0
    %469 = vmatprep.subr.bf16.mxu0 0
    %470 = vmatpush1.bf16.msra.mxu0 0
    %471 = vmatprep.subr.bf16.mxu0 0
    %472 = vmatpush1.bf16.msra.mxu0 0
    %473 = vmatprep.subr.bf16.mxu0 0
    %474 = vmatpush1.bf16.msra.mxu0 0
    %475 = vmatprep.subr.bf16.mxu0 0
    %476 = vmatpush1.bf16.msra.mxu0 0
    %477 = vmatprep.subr.bf16.mxu0 0
    %478 = vmatpush1.bf16.msra.mxu0 0
    %479 = vmatprep.subr.bf16.mxu0 0
    %480 = vmatpush1.bf16.msra.mxu0 0
    %481 = vmatprep.subr.bf16.mxu0 0
    %482 = vmatpush1.bf16.msra.mxu0 0
    %483 = vmatprep.subr.bf16.mxu0 0
    %484 = vmatpush1.bf16.msra.mxu0 0
    %485 = vmatprep.subr.bf16.mxu0 0
    %486 = vmatpush1.bf16.msra.mxu0 0
    %487 = vmatprep.subr.bf16.mxu0 0
    %488 = vmatpush1.bf16.msra.mxu0 0
    %489 = vmatprep.subr.bf16.mxu0 0
    %490 = vmatpush1.bf16.msra.mxu0 0
    %491 = vmatprep.subr.bf16.mxu0 0
    %492 = vmatpush1.bf16.msra.mxu0 0
    %493 = vmatprep.subr.bf16.mxu0 0
    %494 = vmatpush1.bf16.msra.mxu0 0
    %495 = vmatprep.mubr.bf16.mxu0 0
    %496 = vmatmul.mubr.bf16.gmra.mrb[0].mxu0 %v461
    %v497 = vpop.f32.mrb[0].mxu0
    %v498 = vadd.f32 %v419, %v497
    %v499 = vpop.f32.mrb[0].mxu0
    %v500 = vpop.f32.mrb[0].mxu0
    %v501 = vpop.f32.mrb[0].mxu0
    %502 = vdwg.mxu0
    %v503 = vld [vmem:[%s5] sm:$0x1]
    %v505 = vlaneseq
    %v506 = vshrl.u32 %v505, 7
    %v507 = vsub.s32 0, %v506
    %v508 = vrot.slane %v503, %v507
    %v510 = vadd.f32 %v498, %v508
    %v511 = vtanh.pop %v510
    %v512 = vld [vmem:[%s6] sm:$0x1]
    %v513 = vunpack.c.l.bf16 %v512
    %v514 = vlaneseq
    %v515 = vshrl.u32 %v514, 7
    %v516 = vsub.s32 0, %v515
    %v517 = vrot.slane %v513, %v516
    %v518 = vmul.f32 %v511, %v517
    %v519 = vsel %vm137, %v518, 0.0
    %520 = vadd.xlane.f32.xlu0 %v519
    %v521 = vpop.xlane.xlu0 %520
    %vm522 = vcmask 7168
    %523 = vst.msk [vmem:[%s7] sm:$0xff] %vm522, %v521
    // Predicated region
    $region34: #{tpu_custom_call.1} parent=1 // pred_check
      _
    $region35: #{tpu_custom_call.1} parent=1 // pred_check_branch
      %525 = sbr.rel (0) target = $region37
    $region36: #{tpu_custom_call.1} parent=1 // pred_region
      _
    $region37: #{tpu_custom_call.1} parent=1 // pred_fallthru
      _
    // Predicated region
    $region38: #{tpu_custom_call.1} parent=1 // pred_check
      _
    $region39: #{tpu_custom_call.1} parent=1 // pred_check_branch
      %527 = sbr.rel (0) target = $region41
    $region40: #{tpu_custom_call.1} parent=1 // pred_region
      _
    $region41: #{tpu_custom_call.1} parent=1 // pred_fallthru
      _
    %528 = vsyncpa [#allocation3], 1

</llo_original>
